<compile_context>
chip_gen: v7x
topology: tpu7x:2x2x1
jax: 0.10.0
libtpu: 0.0.40
codegen_flags: <defaults>
</compile_context>

<pallas_src>
import functools

import jax
import jax.numpy as jnp
import numpy as np
from jax.experimental import pallas as pl
from jax.experimental.pallas import tpu as pltpu

# ---------------- static configuration ----------------
HUBER_DELTA = 1.0
W_MSE, W_MAE, W_HUBER, W_WMSE = 0.4, 0.2, 0.2, 0.2
# WeightedMSELoss default sweetness ranges: (min, max, weight)
SWEETNESS_RANGES = (
    (8.0, 9.5, 1.2),   # low
    (9.5, 11.0, 1.0),  # medium
    (11.0, 13.0, 1.3), # high
)
LANES = 128


def _combined_loss_kernel(p_ref, t_ref, o_ref, acc_ref, *, inv_n):
    # p_ref, t_ref: (block_rows, 128) in VMEM; o_ref: (1, 1) f32; acc_ref: (1, 128) f32 scratch.
    step = pl.program_id(0)

    @pl.when(step == 0)
    def _():
        acc_ref[...] = jnp.zeros_like(acc_ref)

    p = p_ref[...].astype(jnp.float32)
    t = t_ref[...].astype(jnp.float32)

    diff = p - t
    abs_diff = jnp.abs(diff)
    sq = diff * diff  # reused by mse, weighted_mse and the small-branch of huber

    # Per-element coefficient on d^2:  W_mse + W_wmse * sweetness_weight(target).
    # Built directly from precomputed constants (no ones_like + extra multiply).
    coef = jnp.full_like(t, jnp.float32(W_MSE + W_WMSE * 1.0))
    for (lo, hi, wt) in SWEETNESS_RANGES:
        coef = jnp.where((t >= lo) & (t < hi),
                         jnp.float32(W_MSE + W_WMSE * wt), coef)

    # PyTorch F.huber_loss: 0.5*d^2 if |d| < delta else delta*(|d| - 0.5*delta)
    huber = jnp.where(
        abs_diff < jnp.float32(HUBER_DELTA),
        jnp.float32(0.5) * sq,
        jnp.float32(HUBER_DELTA) * (abs_diff - jnp.float32(0.5 * HUBER_DELTA)),
    )

    combined = coef * sq + jnp.float32(W_MAE) * abs_diff + jnp.float32(W_HUBER) * huber

    # Per-lane partial sums into the persistent accumulator (sublane reduce only).
    acc_ref[...] += jnp.sum(combined, axis=0, keepdims=True)

    @pl.when(step == pl.num_programs(0) - 1)
    def _():
        # Single cross-lane reduce + single 1/n scale on the reduced scalar.
        o_ref[...] = jnp.sum(acc_ref[...], axis=1, keepdims=True) * jnp.float32(inv_n)


def combined_loss(predictions, targets, *, max_block_rows=512):
    """JAX wrapper mirroring CombinedLoss.forward (returns a scalar)."""
    p = jnp.squeeze(predictions)
    t = jnp.squeeze(targets)
    if p.shape != t.shape:
        raise ValueError(f"shape mismatch: {p.shape} vs {t.shape}")
    if not jnp.issubdtype(p.dtype, jnp.floating):
        p = p.astype(jnp.float32)
    if not jnp.issubdtype(t.dtype, jnp.floating):
        t = t.astype(jnp.float32)
    if p.ndim == 0:
        p = p.reshape(1)
        t = t.reshape(1)
    p = p.reshape(-1)
    t = t.reshape(-1)
    n = p.shape[0]

    if max_block_rows % 8 != 0:
        raise ValueError("max_block_rows must be a multiple of 8")

    # Sublane-dense tiling: (rows, 128) with rows a multiple of block_rows (mult. of 8).
    rows_needed = pl.cdiv(n, LANES)
    block_rows = min(max_block_rows, 8 * pl.cdiv(rows_needed, 8))
    num_blocks = pl.cdiv(rows_needed, block_rows)
    rows = num_blocks * block_rows
    padded = rows * LANES

    # Pad predictions and targets with the SAME value so diff == 0 on pads and
    # all sub-losses (mse/mae/huber/weighted_mse) contribute exactly zero there.
    p2 = jnp.pad(p, (0, padded - n)).reshape(rows, LANES)
    t2 = jnp.pad(t, (0, padded - n)).reshape(rows, LANES)

    kernel = functools.partial(_combined_loss_kernel, inv_n=1.0 / n)

    # TODO(synk): on v7x, split the grid across the 2 TensorCores (parallel axis
    # emitting per-core partial sums) for ~2x HBM streaming; serial 'arbitrary'
    # accumulation is used here for portability/simplicity.
    out = pl.pallas_call(
        kernel,
        out_shape=jax.ShapeDtypeStruct((1, 1), jnp.float32),
        grid_spec=pltpu.PrefetchScalarGridSpec(
            num_scalar_prefetch=0,
            grid=(num_blocks,),
            in_specs=[
                pl.BlockSpec((block_rows, LANES), lambda i: (i, 0)),
                pl.BlockSpec((block_rows, LANES), lambda i: (i, 0)),
            ],
            out_specs=pl.BlockSpec((1, 1), lambda i: (0, 0)),
            scratch_shapes=[pltpu.VMEM((1, LANES), jnp.float32)],
        ),
        compiler_params=pltpu.CompilerParams(
            dimension_semantics=("arbitrary",),
            vmem_limit_bytes=32 * 1024 * 1024,
        ),
    )(p2, t2)
    return out[0, 0]


def _reference_combined_loss(predictions, targets):
    """Pure-JAX reference replicating the PyTorch CombinedLoss semantics."""
    p = jnp.squeeze(predictions).astype(jnp.float32)
    t = jnp.squeeze(targets).astype(jnp.float32)
    diff = p - t
    abs_diff = jnp.abs(diff)
    mse = jnp.mean(diff * diff)
    mae = jnp.mean(abs_diff)
    huber = jnp.mean(
        jnp.where(abs_diff < HUBER_DELTA,
                  0.5 * diff * diff,
                  HUBER_DELTA * (abs_diff - 0.5 * HUBER_DELTA))
    )
    w = jnp.ones_like(t)
    for (lo, hi, wt) in SWEETNESS_RANGES:
        w = jnp.where((t >= lo) & (t < hi), jnp.float32(wt), w)
    wmse = jnp.mean(diff * diff * w)
    return (W_MSE * mse + W_MAE * mae + W_HUBER * huber + W_WMSE * wmse)


if __name__ == "__main__":
    key = jax.random.PRNGKey(0)
    k1, k2, k3, k4 = jax.random.split(key, 4)

    # Case 1: tiny batch; predictions shaped [batch_size, 1] as in the PyTorch docstring.
    B = 8
    targets = 8.0 + 5.0 * jax.random.uniform(k1, (B,), dtype=jnp.float32)
    predictions = (targets + 0.5 * jax.random.normal(k2, (B,), dtype=jnp.float32)
                   ).reshape(B, 1)
    out = jax.block_until_ready(combined_loss(predictions, targets))
    ref = _reference_combined_loss(predictions, targets)
    assert np.allclose(np.asarray(out), np.asarray(ref), rtol=5e-5, atol=1e-5), (
        f"mismatch (case 1): pallas={out} ref={ref}"
    )

    # Case 2: ragged batch exercising padding + a multi-step grid with the
    # pl.when-gated accumulator (small block_rows forces num_blocks > 1).
    B2 = 5000
    t2 = 8.0 + 5.0 * jax.random.uniform(k3, (B2,), dtype=jnp.float32)
    p2 = t2 + 0.5 * jax.random.normal(k4, (B2,), dtype=jnp.float32)
    out2 = jax.block_until_ready(combined_loss(p2, t2, max_block_rows=8))
    ref2 = _reference_combined_loss(p2, t2)
    assert np.allclose(np.asarray(out2), np.asarray(ref2), rtol=5e-5, atol=1e-5), (
        f"mismatch (case 2): pallas={out2} ref={ref2}"
    )

    print("KERNEL_OK")
</pallas_src>

<mosaic_0001>
module attributes {stable_mosaic.version = 11 : i64} {
  func.func @_combined_loss_kernel(%arg0: i32, %arg1: memref<8x128xf32, #tpu.memory_space<vmem>>, %arg2: memref<8x128xf32, #tpu.memory_space<vmem>>, %arg3: memref<1x1xf32, #tpu.memory_space<vmem>>, %arg4: memref<1x128xf32, #tpu.memory_space<vmem>>) attributes {dimension_semantics = [#tpu.dimension_semantics<arbitrary>], iteration_bounds = array<i64: 1>, scalar_prefetch = 0 : i64, scratch_operands = 1 : i64, tpu.core_type = #tpu.core_type<tc>, window_params = [{transform_indices = @transform_0, window_bounds = array<i64: 8, 128>}, {transform_indices = @transform_1, window_bounds = array<i64: 8, 128>}, {pipeline_mode = #tpu.pipeline_mode<synchronous>, transform_indices = @transform_2, window_bounds = array<i64: 1, 1>}]} {
    %c0_i32 = arith.constant 0 : i32
    %0 = arith.cmpi eq, %arg0, %c0_i32 : i32
    %1 = arith.extui %0 : i1 to i32
    %c0_i32_0 = arith.constant 0 : i32
    %2 = arith.cmpi ne, %1, %c0_i32_0 : i32
    scf.if %2 {
      %cst_26 = arith.constant 0.000000e+00 : f32
      %54 = vector.broadcast %cst_26 : f32 to vector<1x128xf32>
      %c0_27 = arith.constant 0 : index
      %c0_28 = arith.constant 0 : index
      %55 = vector.load %arg4[%c0_27, %c0_28] : memref<1x128xf32, #tpu.memory_space<vmem>>, vector<1x128xf32>
      tpu.vector_store %arg4[%c0_27, %c0_28], %54 {strides = array<i32>} : memref<1x128xf32, #tpu.memory_space<vmem>>, vector<1x128xf32>,
    } else {
    }
    %c0 = arith.constant 0 : index
    %c0_1 = arith.constant 0 : index
    %3 = vector.load %arg1[%c0, %c0_1] : memref<8x128xf32, #tpu.memory_space<vmem>>, vector<8x128xf32>
    %c0_2 = arith.constant 0 : index
    %c0_3 = arith.constant 0 : index
    %4 = vector.load %arg2[%c0_2, %c0_3] : memref<8x128xf32, #tpu.memory_space<vmem>>, vector<8x128xf32>
    %5 = arith.subf %3, %4 : vector<8x128xf32>
    %6 = math.absf %5 : vector<8x128xf32>
    %7 = arith.mulf %5, %5 : vector<8x128xf32>
    %cst = arith.constant 6.000000e-01 : f32
    %8 = vector.broadcast %cst : f32 to vector<8x128xf32>
    %cst_4 = arith.constant 8.000000e+00 : f32
    %9 = vector.broadcast %cst_4 : f32 to vector<8x128xf32>
    %10 = arith.cmpf oge, %4, %9 : vector<8x128xf32>
    %cst_5 = arith.constant 9.500000e+00 : f32
    %11 = vector.broadcast %cst_5 : f32 to vector<8x128xf32>
    %12 = arith.cmpf olt, %4, %11 : vector<8x128xf32>
    %13 = arith.andi %10, %12 : vector<8x128xi1>
    %cst_6 = arith.constant 6.400000e-01 : f32
    %14 = vector.broadcast %cst_6 : f32 to vector<8x128xf32>
    %15 = arith.select %13, %14, %8 : vector<8x128xi1>, vector<8x128xf32>
    %cst_7 = arith.constant 9.500000e+00 : f32
    %16 = vector.broadcast %cst_7 : f32 to vector<8x128xf32>
    %17 = arith.cmpf oge, %4, %16 : vector<8x128xf32>
    %cst_8 = arith.constant 1.100000e+01 : f32
    %18 = vector.broadcast %cst_8 : f32 to vector<8x128xf32>
    %19 = arith.cmpf olt, %4, %18 : vector<8x128xf32>
    %20 = arith.andi %17, %19 : vector<8x128xi1>
    %cst_9 = arith.constant 6.000000e-01 : f32
    %21 = vector.broadcast %cst_9 : f32 to vector<8x128xf32>
    %22 = arith.select %20, %21, %15 : vector<8x128xi1>, vector<8x128xf32>
    %cst_10 = arith.constant 1.100000e+01 : f32
    %23 = vector.broadcast %cst_10 : f32 to vector<8x128xf32>
    %24 = arith.cmpf oge, %4, %23 : vector<8x128xf32>
    %cst_11 = arith.constant 1.300000e+01 : f32
    %25 = vector.broadcast %cst_11 : f32 to vector<8x128xf32>
    %26 = arith.cmpf olt, %4, %25 : vector<8x128xf32>
    %27 = arith.andi %24, %26 : vector<8x128xi1>
    %cst_12 = arith.constant 6.600000e-01 : f32
    %28 = vector.broadcast %cst_12 : f32 to vector<8x128xf32>
    %29 = arith.select %27, %28, %22 : vector<8x128xi1>, vector<8x128xf32>
    %cst_13 = arith.constant 1.000000e+00 : f32
    %30 = vector.broadcast %cst_13 : f32 to vector<8x128xf32>
    %31 = arith.cmpf olt, %6, %30 : vector<8x128xf32>
    %cst_14 = arith.constant 5.000000e-01 : f32
    %32 = vector.broadcast %cst_14 : f32 to vector<8x128xf32>
    %33 = arith.mulf %32, %7 : vector<8x128xf32>
    %cst_15 = arith.constant 5.000000e-01 : f32
    %34 = vector.broadcast %cst_15 : f32 to vector<8x128xf32>
    %35 = arith.subf %6, %34 : vector<8x128xf32>
    %cst_16 = arith.constant 1.000000e+00 : f32
    %36 = vector.broadcast %cst_16 : f32 to vector<8x128xf32>
    %37 = arith.mulf %36, %35 : vector<8x128xf32>
    %38 = arith.select %31, %33, %37 : vector<8x128xi1>, vector<8x128xf32>
    %39 = arith.mulf %29, %7 : vector<8x128xf32>
    %cst_17 = arith.constant 2.000000e-01 : f32
    %40 = vector.broadcast %cst_17 : f32 to vector<8x128xf32>
    %41 = arith.mulf %40, %6 : vector<8x128xf32>
    %42 = arith.addf %39, %41 : vector<8x128xf32>
    %cst_18 = arith.constant 2.000000e-01 : f32
    %43 = vector.broadcast %cst_18 : f32 to vector<8x128xf32>
    %44 = arith.mulf %43, %38 : vector<8x128xf32>
    %45 = arith.addf %42, %44 : vector<8x128xf32>
    %c0_19 = arith.constant 0 : index
    %c0_20 = arith.constant 0 : index
    %46 = vector.load %arg4[%c0_19, %c0_20] : memref<1x128xf32, #tpu.memory_space<vmem>>, vector<1x128xf32>
    %cst_21 = arith.constant dense<0.000000e+00> : vector<128xf32>
    %47 = vector.multi_reduction <add>, %45, %cst_21 [0] : vector<8x128xf32> to vector<128xf32>
    %48 = vector.shape_cast %47 : vector<128xf32> to vector<1x128xf32>
    %49 = arith.addf %46, %48 : vector<1x128xf32>
    %c0_22 = arith.constant 0 : index
    %c0_23 = arith.constant 0 : index
    %50 = vector.load %arg4[%c0_22, %c0_23] : memref<1x128xf32, #tpu.memory_space<vmem>>, vector<1x128xf32>
    tpu.vector_store %arg4[%c0_22, %c0_23], %49 {strides = array<i32>} : memref<1x128xf32, #tpu.memory_space<vmem>>, vector<1x128xf32>,
    %c0_i32_24 = arith.constant 0 : i32
    %51 = arith.cmpi eq, %arg0, %c0_i32_24 : i32
    %52 = arith.extui %51 : i1 to i32
    %c0_i32_25 = arith.constant 0 : i32
    %53 = arith.cmpi ne, %52, %c0_i32_25 : i32
    scf.if %53 {
      %c0_26 = arith.constant 0 : index
      %c0_27 = arith.constant 0 : index
      %54 = vector.load %arg4[%c0_26, %c0_27] : memref<1x128xf32, #tpu.memory_space<vmem>>, vector<1x128xf32>
      %cst_28 = arith.constant dense<0.000000e+00> : vector<1xf32>
      %55 = vector.multi_reduction <add>, %54, %cst_28 [1] : vector<1x128xf32> to vector<1xf32>
      %56 = vector.shape_cast %55 : vector<1xf32> to vector<1x1xf32>
      %cst_29 = arith.constant 1.250000e-01 : f32
      %57 = vector.broadcast %cst_29 : f32 to vector<1x1xf32>
      %58 = arith.mulf %56, %57 : vector<1x1xf32>
      %c0_30 = arith.constant 0 : index
      %c0_31 = arith.constant 0 : index
      %59 = vector.load %arg3[%c0_30, %c0_31] : memref<1x1xf32, #tpu.memory_space<vmem>>, vector<1x1xf32>
      tpu.vector_store %arg3[%c0_30, %c0_31], %58 {strides = array<i32>} : memref<1x1xf32, #tpu.memory_space<vmem>>, vector<1x1xf32>,
    } else {
    }
    return
  }
  func.func @transform_0(%arg0: i32) -> (i32, i32) {
    %c0_i32 = arith.constant 0 : i32
    %c0_i32_0 = arith.constant 0 : i32
    return %arg0, %c0_i32 : i32, i32
  }
  func.func @transform_1(%arg0: i32) -> (i32, i32) {
    %c0_i32 = arith.constant 0 : i32
    %c0_i32_0 = arith.constant 0 : i32
    return %arg0, %c0_i32 : i32, i32
  }
  func.func @transform_2(%arg0: i32) -> (i32, i32) {
    %c0_i32 = arith.constant 0 : i32
    %c0_i32_0 = arith.constant 0 : i32
    %c0_i32_1 = arith.constant 0 : i32
    return %c0_i32, %c0_i32_0 : i32, i32
  }
}

</mosaic_0001>

<llo_original>
// kernel: tpu_custom_call.1
$region0: #{tpu_custom_call.1}
  #allocation0 [shape = 'u32[]', space=smem, size = 0x4, offset = 0x4, fixed_abs, tag = 'smem constant byte address 0x4 - core index']
  #allocation1 [shape = 'u32[144,128]{1,0:T(1,128)}', space=vmem, size = 0x12000, scoped, tag = 'internal scratch']
  #allocation2 [shape = 'f32[1,128]{1,0:T(1,128)}', space=vmem, size = 0x200, scoped, tag = 'scratch operand']
  %s0 = inlined_call_operand.hbm [shape: f32[8,128], index: 0, kind: input, shape index: {}]
  %s1 = inlined_call_operand.hbm [shape: f32[8,128], index: 1, kind: input, shape index: {}]
  %s2 = inlined_call_operand.hbm [shape: f32[1,1], index: 2, kind: output, shape index: {}]
  %s3 = sld [smem:[#allocation0]]
  $region34: #{tpu_custom_call.1} parent=0
    _
  %s5 = ssub.s32 1, %s3
  %s6 = scalar_select 0, %s5, %s3
  $region1: #{tpu_custom_call.1} parent=0
    #allocation3 [shape = 'u8[4096]{0}', space=vmem, size = 0x1000, scoped, tag = 'input window, operand 0, single buffered']
    #allocation4 [shape = 's32[1]{0}', space=sflag, size = 0x4, scoped, tag = 'scoped memory for tpu_custom_call.1']
    #allocation5 [shape = 's32[1]{0}', space=sflag, size = 0x4, scoped, tag = 'scoped memory for tpu_custom_call.1']
    #allocation6 [shape = 'u8[4096]{0}', space=vmem, size = 0x1000, scoped, tag = 'input window, operand 1, single buffered']
    #allocation7 [shape = 's32[1]{0}', space=sflag, size = 0x4, scoped, tag = 'scoped memory for tpu_custom_call.1']
    #allocation8 [shape = 'u8[512]{0}', space=vmem, size = 0x400, scoped, tag = 'output window, operand 0, single buffered']
    %7 = vsyncpa [#allocation4], 0
    %8 = vsyncpa [#allocation7], 0
    %9 = vsyncpa [#allocation5], 0
    // Predicated region
    $region2: #{tpu_custom_call.1} parent=1 // pred_check
      _
    $region3: #{tpu_custom_call.1} parent=1 // pred_check_branch
      %11 = sbr.rel (0) target = $region5
    $region4: #{tpu_custom_call.1} parent=1 // pred_region
      %s13 = ssub.s32 128, 128
      %14 = vsyncadd [#allocation4], %s13
      %s16 = sshll.u32 [#allocation3], 4
      %s17 = int_to_ptr.vmem [resolvable:$true] %s16
      %19 = dma.hbm_to_vmem [thread:$0]  %s0, 128, %s17, [#allocation4]
    $region5: #{tpu_custom_call.1} parent=1 // pred_fallthru
      _
    // Predicated region
    $region6: #{tpu_custom_call.1} parent=1 // pred_check
      _
    $region7: #{tpu_custom_call.1} parent=1 // pred_check_branch
      %21 = sbr.rel (0) target = $region9
    $region8: #{tpu_custom_call.1} parent=1 // pred_region
      %s23 = ssub.s32 128, 128
      %24 = vsyncadd [#allocation7], %s23
      %s26 = sshll.u32 [#allocation6], 4
      %s27 = int_to_ptr.vmem [resolvable:$true] %s26
      %29 = dma.hbm_to_vmem [thread:$0]  %s1, 128, %s27, [#allocation7]
    $region9: #{tpu_custom_call.1} parent=1 // pred_fallthru
      _
    // Predicated region
    $region10: #{tpu_custom_call.1} parent=1 // pred_check
      _
    $region11: #{tpu_custom_call.1} parent=1 // pred_check_branch
      %31 = sbr.rel (0) target = $region13
    $region12: #{tpu_custom_call.1} parent=1 // pred_region
      %32 = dma.done [#allocation4], 128
    $region13: #{tpu_custom_call.1} parent=1 // pred_fallthru
      _
    // Predicated region
    $region14: #{tpu_custom_call.1} parent=1 // pred_check
      _
    $region15: #{tpu_custom_call.1} parent=1 // pred_check_branch
      %34 = sbr.rel (0) target = $region17
    $region16: #{tpu_custom_call.1} parent=1 // pred_region
      %35 = dma.done [#allocation7], 128
    $region17: #{tpu_custom_call.1} parent=1 // pred_fallthru
      _
    %p36 = scmp.eq.s32.totalorder 0, 0
    // Predicated region
    $region18: #{tpu_custom_call.1} parent=1 // pred_check
      %p37 = pneg %p36
    $region19: #{tpu_custom_call.1} parent=1 // pred_check_branch
      %39 = sbr.rel (%p37) target = $region21
    $region20: #{tpu_custom_call.1} parent=1 // pred_region
      %40 = vst [vmem:[#allocation2] sm:$0x1] 0.0
    $region21: #{tpu_custom_call.1} parent=1 // pred_fallthru
      _
    %v41 = vld [vmem:[#allocation3] sm:$0xff]
    %v42 = vld [vmem:[#allocation6] sm:$0xff]
    %v43 = vsub.f32 %v41, %v42
    %v44 = vand.u32 2147483647, %v43
    %v45 = vmul.f32 %v43, %v43
    %vm46 = vcmp.ge.f32.partialorder %v42, 8.0
    %vm47 = vcmp.lt.f32.partialorder %v42, 9.5
    %vm48 = vmand %vm46, %vm47
    %v49 = vsel %vm48, 0.64, 0.6
    %vm50 = vcmp.ge.f32.partialorder %v42, 9.5
    %vm51 = vcmp.lt.f32.partialorder %v42, 11.0
    %vm52 = vmand %vm50, %vm51
    %v53 = vsel %vm52, 0.6, %v49
    %vm54 = vcmp.ge.f32.partialorder %v42, 11.0
    %vm55 = vcmp.lt.f32.partialorder %v42, 13.0
    %vm56 = vmand %vm54, %vm55
    %v57 = vsel %vm56, 0.66, %v53
    %vm58 = vcmp.lt.f32.partialorder %v44, 1.0
    %v59 = vmul.f32 %v45, 0.5
    %v60 = vsub.f32 %v44, 0.5
    %v61 = vsel %vm58, %v59, %v60
    %v62 = vmul.f32 %v57, %v45
    %v63 = vmul.f32 %v44, 0.2
    %v64 = vadd.f32 %v62, %v63
    %v65 = vmul.f32 %v61, 0.2
    %v66 = vadd.f32 %v64, %v65
    %v67 = vld [vmem:[#allocation2] sm:$0x1]
    %v68 = vrot.slane %v66, 4
    %v69 = vadd.f32 %v66, %v68
    %v70 = vrot.slane %v69, 2
    %v71 = vadd.f32 %v69, %v70
    %v72 = vrot.slane %v71, 1
    %v73 = vadd.f32 %v71, %v72
    %v74 = vadd.f32 %v67, %v73
    %75 = vst [vmem:[#allocation2] sm:$0x1] %v74
    // Predicated region
    $region22: #{tpu_custom_call.1} parent=1 // pred_check
      %p76 = pneg %p36
    $region23: #{tpu_custom_call.1} parent=1 // pred_check_branch
      %78 = sbr.rel (%p76) target = $region25
    $region24: #{tpu_custom_call.1} parent=1 // pred_region
      %v79 = vld [vmem:[#allocation2] sm:$0x1]
      %vm80 = vcmask 1040384
      %v81 = vsel %vm80, %v79, 0.0
      %82 = vadd.xlane.f32.xlu0 %v81
      %v83 = vpop.xlane.xlu0 %82
      %v84 = vmul.f32 %v83, 0.125
      %vm85 = vcmask 0
      %86 = vst.msk [vmem:[#allocation8] sm:$0x1] %vm85, %v84
    $region25: #{tpu_custom_call.1} parent=1 // pred_fallthru
      _
    // Predicated region
    $region26: #{tpu_custom_call.1} parent=1 // pred_check
      _
    $region27: #{tpu_custom_call.1} parent=1 // pred_check_branch
      %88 = sbr.rel (0) target = $region29
    $region28: #{tpu_custom_call.1} parent=1 // pred_region
      %s90 = ssub.s32 16, 16
      %91 = vsyncadd [#allocation5], %s90
      %s93 = sshll.u32 [#allocation8], 4
      %s94 = int_to_ptr.vmem [resolvable:$true] %s93
      %96 = dma.vmem_to_hbm [thread:$0]  %s94, 16, %s2, [#allocation5]
    $region29: #{tpu_custom_call.1} parent=1 // pred_fallthru
      _
    // Predicated region
    $region30: #{tpu_custom_call.1} parent=1 // pred_check
      _
    $region31: #{tpu_custom_call.1} parent=1 // pred_check_branch
      %98 = sbr.rel (0) target = $region33
    $region32: #{tpu_custom_call.1} parent=1 // pred_region
      %99 = dma.done [#allocation5], 16
    $region33: #{tpu_custom_call.1} parent=1 // pred_fallthru
      _
    %100 = vsyncpa [#allocation4], 1
    %101 = vsyncpa [#allocation7], 1
    %102 = vsyncpa [#allocation5], 1

</llo_original>
